<compile_context>
chip_gen: v6e
topology: v6e:2x2x1
jax: 0.10.0
libtpu: 0.0.40
codegen_flags: <defaults>
</compile_context>

<pallas_src>
import functools
import math

import jax
import jax.numpy as jnp
from jax.experimental import pallas as pl
from jax.experimental.pallas import tpu as pltpu

_VMEM_LIMIT = 48 * 1024 * 1024  # safe on v5e/v6e (128 MiB) and v7x (64 MiB)


def _round_up(x, m):
    return ((x + m - 1) // m) * m


def _pick_tile(dim, max_tile, align):
    """Largest multiple of `align` <= max_tile that divides `dim` (dim % align == 0)."""
    t = min(max_tile, dim)
    t -= t % align
    while t > align and dim % t != 0:
        t -= align
    return max(t, align)


def _apply_act(y, activation):
    if activation == "relu":
        return jnp.maximum(y, 0.0)
    if activation == "relu6":
        return jnp.clip(y, 0.0, 6.0)
    if activation == "sig":
        return jax.nn.sigmoid(y)
    return y


def _weight_spec(block_shape, index_map, multi_buffer):
    """BlockSpec for the weight stream; 3-deep pipeline for tiny-batch kernels."""
    if multi_buffer and hasattr(pl, "Buffered"):
        try:
            return pl.BlockSpec(block_shape, index_map, pipeline_mode=pl.Buffered(3))
        except TypeError:
            pass
    return pl.BlockSpec(block_shape, index_map)


# --------------------------------------------------------------------------- #
# Kernels
# --------------------------------------------------------------------------- #
def _linear_single_kernel(x_ref, w_ref, b_ref, o_ref, *, activation):
    """y = act(x @ w + b), K fits a single tile (no accumulator scratch)."""
    y = jnp.dot(x_ref[...], w_ref[...], preferred_element_type=jnp.float32)
    y = _apply_act(y + b_ref[...].astype(jnp.float32), activation)
    o_ref[...] = y.astype(o_ref.dtype)


def _linear_acc_kernel(x_ref, w_ref, b_ref, o_ref, acc_ref, *, activation):
    """y = act(x @ w + b) with K reduction over the innermost grid axis."""
    k = pl.program_id(2)

    @pl.when(k == 0)
    def _():
        acc_ref[...] = jnp.zeros_like(acc_ref)

    acc_ref[...] += jnp.dot(x_ref[...], w_ref[...],
                            preferred_element_type=jnp.float32)

    @pl.when(k == pl.num_programs(2) - 1)
    def _():
        y = _apply_act(acc_ref[...] + b_ref[...].astype(jnp.float32), activation)
        o_ref[...] = y.astype(o_ref.dtype)


def _mlp_fused_kernel(x_ref, w1_ref, b1_ref, w2_ref, b2_ref, o_ref, h_ref,
                      *, activation):
    """y = act(x @ w1 + b1) @ w2 + b2; h stays resident in VMEM across j."""
    j = pl.program_id(1)

    @pl.when(j == 0)
    def _():
        h = jnp.dot(x_ref[...], w1_ref[...], preferred_element_type=jnp.float32)
        h = _apply_act(h + b1_ref[...].astype(jnp.float32), activation)
        h_ref[...] = h.astype(h_ref.dtype)

    y = jnp.dot(h_ref[...], w2_ref[...], preferred_element_type=jnp.float32)
    y = y + b2_ref[...].astype(jnp.float32)
    o_ref[...] = y.astype(o_ref.dtype)


# --------------------------------------------------------------------------- #
# Wrappers
# --------------------------------------------------------------------------- #
def linear_pallas(x, w_pad, b_pad, n_out, activation=None, *,
                  compute_dtype=jnp.bfloat16,
                  tm_max=256, tn_max=512, tk_max=2048):
    """y[:M, :n_out] = act(x @ W + b).  w_pad:(Kp,Np) and b_pad:(1,Np) are
    pre-padded (128-aligned, zero padding) so no weight padding happens here."""
    M, K = x.shape
    Kp, Np = w_pad.shape
    assert Kp >= K and b_pad.shape == (1, Np)
    out_dtype = x.dtype

    sub = 16 if jnp.dtype(compute_dtype).itemsize < 4 else 8
    Mp = _round_up(max(M, 1), sub)

    xp = x.astype(compute_dtype)
    if Mp != M or Kp != K:
        xp = jnp.pad(xp, ((0, Mp - M), (0, Kp - K)))  # tiny (M is small); zero K-pad is exact

    tm = _pick_tile(Mp, tm_max, sub)
    tn = _pick_tile(Np, tn_max, 128)
    tk = _pick_tile(Kp, tk_max, 128)

    if Kp == tk:
        # Fast path: whole K in one tile -> no accumulator, no reduction axis.
        grid = (Mp // tm, Np // tn)
        multi_buffer = (Mp <= 16) and (grid[0] * grid[1] >= 3)
        kernel = functools.partial(_linear_single_kernel, activation=activation)
        in_specs = [
            pl.BlockSpec((tm, Kp), lambda i, j: (i, 0)),
            _weight_spec((Kp, tn), lambda i, j: (0, j), multi_buffer),
            pl.BlockSpec((1, tn), lambda i, j: (0, j)),
        ]
        out_specs = pl.BlockSpec((tm, tn), lambda i, j: (i, j))
        scratch = []
        dims = ("parallel", "parallel")
    else:
        grid = (Mp // tm, Np // tn, Kp // tk)
        multi_buffer = (Mp <= 16) and (grid[0] * grid[1] * grid[2] >= 3)
        kernel = functools.partial(_linear_acc_kernel, activation=activation)
        in_specs = [
            pl.BlockSpec((tm, tk), lambda i, j, k: (i, k)),
            _weight_spec((tk, tn), lambda i, j, k: (k, j), multi_buffer),
            pl.BlockSpec((1, tn), lambda i, j, k: (0, j)),
        ]
        out_specs = pl.BlockSpec((tm, tn), lambda i, j, k: (i, j))
        scratch = [pltpu.VMEM((tm, tn), jnp.float32)]
        dims = ("parallel", "parallel", "arbitrary")

    out = pl.pallas_call(
        kernel,
        out_shape=jax.ShapeDtypeStruct((Mp, Np), out_dtype),
        grid_spec=pltpu.PrefetchScalarGridSpec(
            num_scalar_prefetch=0,
            grid=grid,
            in_specs=in_specs,
            out_specs=out_specs,
            scratch_shapes=scratch,
        ),
        compiler_params=pltpu.CompilerParams(
            dimension_semantics=dims,
            vmem_limit_bytes=_VMEM_LIMIT,
        ),
    )(xp, w_pad, b_pad)

    return out[:M, :n_out]


def mlp_fused_pallas(x, w1_pad, b1_pad, w2_pad, b2_pad, n_out, activation, *,
                     compute_dtype=jnp.bfloat16, tm_max=256, tn_max=512):
    """y = act(x @ W1 + b1) @ W2 + b2 in a single pallas_call (h kept in VMEM)."""
    M, K1 = x.shape
    K1p, Midp = w1_pad.shape
    Midp2, Np = w2_pad.shape
    assert Midp == Midp2 and b1_pad.shape == (1, Midp) and b2_pad.shape == (1, Np)
    out_dtype = x.dtype

    sub = 16 if jnp.dtype(compute_dtype).itemsize < 4 else 8
    Mp = _round_up(max(M, 1), sub)

    xp = x.astype(compute_dtype)
    if Mp != M or K1p != K1:
        xp = jnp.pad(xp, ((0, Mp - M), (0, K1p - K1)))

    tm = _pick_tile(Mp, tm_max, sub)
    tn = _pick_tile(Np, tn_max, 128)

    grid = (Mp // tm, Np // tn)
    multi_buffer = (Mp <= 16) and (grid[0] * grid[1] >= 3)

    out = pl.pallas_call(
        functools.partial(_mlp_fused_kernel, activation=activation),
        out_shape=jax.ShapeDtypeStruct((Mp, Np), out_dtype),
        grid_spec=pltpu.PrefetchScalarGridSpec(
            num_scalar_prefetch=0,
            grid=grid,
            in_specs=[
                pl.BlockSpec((tm, K1p), lambda i, j: (i, 0)),
                pl.BlockSpec((K1p, Midp), lambda i, j: (0, 0)),
                pl.BlockSpec((1, Midp), lambda i, j: (0, 0)),
                _weight_spec((Midp, tn), lambda i, j: (0, j), multi_buffer),
                pl.BlockSpec((1, tn), lambda i, j: (0, j)),
            ],
            out_specs=pl.BlockSpec((tm, tn), lambda i, j: (i, j)),
            scratch_shapes=[pltpu.VMEM((tm, Midp), compute_dtype)],
        ),
        compiler_params=pltpu.CompilerParams(
            dimension_semantics=("parallel", "arbitrary"),
            vmem_limit_bytes=_VMEM_LIMIT,
        ),
    )(xp, w1_pad, b1_pad, w2_pad, b2_pad)

    return out[:M, :n_out]


# --------------------------------------------------------------------------- #
# Module
# --------------------------------------------------------------------------- #
def _init_linear(key, fan_in, fan_out, dtype):
    """PyTorch nn.Linear default init; weight stored transposed as (in, out)."""
    kw, kb = jax.random.split(key)
    bound = 1.0 / math.sqrt(fan_in)
    w = jax.random.uniform(kw, (fan_in, fan_out), jnp.float32, -bound, bound)
    b = jax.random.uniform(kb, (fan_out,), jnp.float32, -bound, bound)
    return w.astype(dtype), b.astype(dtype)


def _pad_params(w, b):
    """Zero-pad to 128-aligned (Kp, Np) / (1, Np) once, at init time."""
    K, N = w.shape
    Kp, Np = _round_up(K, 128), _round_up(N, 128)
    w_pad = w if (Kp == K and Np == N) else jnp.pad(w, ((0, Kp - K), (0, Np - N)))
    b_pad = (b if Np == N else jnp.pad(b, (0, Np - N))).reshape(1, Np)
    return w_pad, b_pad


class Clssifier:
    """JAX/Pallas port of xmodels.scale_resnet.Clssifier (eval-mode forward)."""

    _ACTIVE = ("relu", "sig", "relu6")

    def __init__(self, indepth, middepth=0, outdepth=1000, expansion=1,
                 dropout=(0,), active="relu", *, key, param_dtype=jnp.bfloat16):
        assert isinstance(dropout, (list, tuple))
        assert active in self._ACTIVE
        # TODO(synk): training-mode Dropout (p>0) would need a pltpu.prng_* mask
        # in-kernel; only eval-mode / p=0 (identity) is supported here.
        assert all(p == 0 for p in dropout), "only p=0 / eval-mode dropout supported"
        self.dropout = tuple(dropout)
        self.middepth = middepth
        self.expansion = expansion
        self.active = active
        self.param_dtype = param_dtype
        self.outdepth = outdepth

        if middepth == 0:
            assert len(self.dropout) >= 1
            self.w, self.b = _init_linear(key, indepth * expansion, outdepth, param_dtype)
            self.w_pad, self.b_pad = _pad_params(self.w, self.b)
        else:
            assert len(self.dropout) == 2
            k1, k2 = jax.random.split(key)
            self.w1, self.b1 = _init_linear(k1, indepth, middepth, param_dtype)
            self.w2, self.b2 = _init_linear(k2, middepth, outdepth, param_dtype)
            self.w1_pad, self.b1_pad = _pad_params(self.w1, self.b1)
            self.w2_pad, self.b2_pad = _pad_params(self.w2, self.b2)

    def __call__(self, x):
        if self.middepth == 0:
            return linear_pallas(x, self.w_pad, self.b_pad, self.outdepth,
                                 activation=None, compute_dtype=self.param_dtype)

        # Fuse fc1 + act + fc2 if the resident tiles comfortably fit VMEM.
        K1p, Midp = self.w1_pad.shape
        _, Np = self.w2_pad.shape
        isz = jnp.dtype(self.param_dtype).itemsize
        tm_est = min(256, _round_up(max(x.shape[0], 1), 16))
        tn_est = min(512, Np)
        resident = (2 * (tm_est * K1p + K1p * Midp + Midp * tn_est + tm_est * tn_est * 2)
                    + tm_est * Midp) * isz
        if resident <= 24 * 1024 * 1024:
            return mlp_fused_pallas(x, self.w1_pad, self.b1_pad,
                                    self.w2_pad, self.b2_pad, self.outdepth,
                                    self.active, compute_dtype=self.param_dtype)

        # Fallback: two fused matmul+bias(+act) kernels.
        h = linear_pallas(x, self.w1_pad, self.b1_pad, self.middepth,
                          activation=self.active, compute_dtype=self.param_dtype)
        return linear_pallas(h, self.w2_pad, self.b2_pad, self.outdepth,
                             activation=None, compute_dtype=self.param_dtype)


# --------------------------------------------------------------------------- #
# Self-test
# --------------------------------------------------------------------------- #
if __name__ == "__main__":
    key = jax.random.PRNGKey(0)
    kx, km0, km1, k3 = jax.random.split(key, 4)

    batch, indepth = 2, 32
    x = jax.random.normal(kx, (batch, indepth), dtype=jnp.float32)
    xb = x.astype(jnp.bfloat16)

    # Path 1: middepth == 0 (Dropout -> Linear); single-K fast-path kernel.
    clf0 = Clssifier(indepth=indepth, middepth=0, outdepth=16, expansion=1,
                     dropout=(0,), key=km0)
    y0 = clf0(x)

    # Path 2: middepth > 0 (Dropout -> Linear -> ReLU -> Dropout -> Linear);
    # fully fused fc1 + act + fc2 kernel with h resident in VMEM.
    clf1 = Clssifier(indepth=indepth, middepth=24, outdepth=10, expansion=1,
                     dropout=(0, 0), active="relu", key=km1)
    y1 = clf1(x)

    # Extra coverage: force the multi-K accumulator kernel + relu6 path.
    kw3, kb3, kx3 = jax.random.split(k3, 3)
    x3 = jax.random.normal(kx3, (batch, 256), dtype=jnp.float32)
    w3 = jax.random.uniform(kw3, (256, 384), jnp.float32, -0.05, 0.05).astype(jnp.bfloat16)
    b3 = jax.random.uniform(kb3, (384,), jnp.float32, -0.05, 0.05).astype(jnp.bfloat16)
    y3 = linear_pallas(x3, w3, b3.reshape(1, 384), 384, activation="relu6",
                       tk_max=128, tn_max=128)

    jax.block_until_ready((y0, y1, y3))

    assert y0.shape == (batch, 16)
    assert y1.shape == (batch, 10)
    assert y3.shape == (batch, 384)

    # Pure-JAX references with identical arithmetic (bf16 operands, f32 accumulate).
    w0 = clf0.w_pad[:indepth, :16]
    b0 = clf0.b_pad[0, :16].astype(jnp.float32)
    ref0 = jnp.dot(xb, w0, preferred_element_type=jnp.float32) + b0

    w1 = clf1.w1_pad[:indepth, :24]
    b1 = clf1.b1_pad[0, :24].astype(jnp.float32)
    w2 = clf1.w2_pad[:24, :10]
    b2 = clf1.b2_pad[0, :10].astype(jnp.float32)
    h_ref = jnp.maximum(jnp.dot(xb, w1, preferred_element_type=jnp.float32) + b1,
                        0.0).astype(jnp.bfloat16)
    ref1 = jnp.dot(h_ref, w2, preferred_element_type=jnp.float32) + b2

    x3b = x3.astype(jnp.bfloat16)
    ref3 = jnp.clip(jnp.dot(x3b, w3, preferred_element_type=jnp.float32)
                    + b3.astype(jnp.float32), 0.0, 6.0)

    assert jnp.allclose(y0, ref0, atol=1e-2, rtol=1e-2)
    assert jnp.allclose(y1, ref1, atol=1e-2, rtol=1e-2)
    assert jnp.allclose(y3, ref3, atol=1e-2, rtol=1e-2)

    print("KERNEL_OK")
</pallas_src>

<mosaic_0001>
module attributes {stable_mosaic.version = 11 : i64} {
  func.func @_linear_single_kernel(%arg0: i32, %arg1: i32, %arg2: memref<16x128xbf16, #tpu.memory_space<vmem>>, %arg3: memref<128x128xbf16, #tpu.memory_space<vmem>>, %arg4: memref<1x128xbf16, #tpu.memory_space<vmem>>, %arg5: memref<16x128xf32, #tpu.memory_space<vmem>>) attributes {dimension_semantics = [#tpu.dimension_semantics<parallel>, #tpu.dimension_semantics<parallel>], iteration_bounds = array<i64: 1, 1>, scalar_prefetch = 0 : i64, scratch_operands = 0 : i64, tpu.core_type = #tpu.core_type<tc>, window_params = [{transform_indices = @transform_0, window_bounds = array<i64: 16, 128>}, {transform_indices = @transform_1, window_bounds = array<i64: 128, 128>}, {transform_indices = @transform_2, window_bounds = array<i64: 1, 128>}, {transform_indices = @transform_3, window_bounds = array<i64: 16, 128>}]} {
    %c0 = arith.constant 0 : index
    %c0_0 = arith.constant 0 : index
    %0 = vector.load %arg2[%c0, %c0_0] : memref<16x128xbf16, #tpu.memory_space<vmem>>, vector<16x128xbf16>
    %c0_1 = arith.constant 0 : index
    %c0_2 = arith.constant 0 : index
    %1 = vector.load %arg3[%c0_1, %c0_2] : memref<128x128xbf16, #tpu.memory_space<vmem>>, vector<128x128xbf16>
    %cst = arith.constant dense<0.000000e+00> : vector<16x128xf32>
    %2 = tpu.matmul %0, %1, %cst {dimension_numbers = #tpu.dot_dimension_numbers<[1], [0], [0], [1], [0, 0, 1, 1], [], []>} : vector<16x128xbf16>, vector<128x128xbf16>, vector<16x128xf32> -> vector<16x128xf32>
    %c0_3 = arith.constant 0 : index
    %c0_4 = arith.constant 0 : index
    %3 = vector.load %arg4[%c0_3, %c0_4] : memref<1x128xbf16, #tpu.memory_space<vmem>>, vector<1x128xbf16>
    %4 = arith.extf %3 : vector<1x128xbf16> to vector<1x128xf32>
    %5 = vector.broadcast %4 : vector<1x128xf32> to vector<16x128xf32>
    %6 = arith.addf %2, %5 : vector<16x128xf32>
    %c0_5 = arith.constant 0 : index
    %c0_6 = arith.constant 0 : index
    %7 = vector.load %arg5[%c0_5, %c0_6] : memref<16x128xf32, #tpu.memory_space<vmem>>, vector<16x128xf32>
    tpu.vector_store %arg5[%c0_5, %c0_6], %6 {strides = array<i32>} : memref<16x128xf32, #tpu.memory_space<vmem>>, vector<16x128xf32>,
    return
  }
  func.func @transform_0(%arg0: i32, %arg1: i32) -> (i32, i32) {
    %c0_i32 = arith.constant 0 : i32
    %c0_i32_0 = arith.constant 0 : i32
    return %arg0, %c0_i32 : i32, i32
  }
  func.func @transform_1(%arg0: i32, %arg1: i32) -> (i32, i32) {
    %c0_i32 = arith.constant 0 : i32
    %c0_i32_0 = arith.constant 0 : i32
    return %c0_i32, %arg1 : i32, i32
  }
  func.func @transform_2(%arg0: i32, %arg1: i32) -> (i32, i32) {
    %c0_i32 = arith.constant 0 : i32
    %c0_i32_0 = arith.constant 0 : i32
    return %c0_i32, %arg1 : i32, i32
  }
  func.func @transform_3(%arg0: i32, %arg1: i32) -> (i32, i32) {
    %c0_i32 = arith.constant 0 : i32
    return %arg0, %arg1 : i32, i32
  }
}

</mosaic_0001>

<llo_original>
// kernel: tpu_custom_call.1
$region0: #{tpu_custom_call.1}
  #allocation0 [shape = 'u32[]', space=smem, size = 0x4, offset = 0x4, fixed_abs, tag = 'smem constant byte address 0x4 - core index']
  #allocation1 [shape = 'u32[144,128]{1,0:T(1,128)}', space=vmem, size = 0x12000, scoped, tag = 'internal scratch']
  %s0 = inlined_call_operand.hbm [shape: bf16[16,128], index: 0, kind: input, shape index: {}]
  %s1 = inlined_call_operand.hbm [shape: bf16[128,128], index: 1, kind: input, shape index: {}]
  %s2 = inlined_call_operand.vmem [shape: bf16[1,128], index: 2, kind: input, shape index: {}]
  %s3 = inlined_call_operand.hbm [shape: f32[16,128], index: 3, kind: output, shape index: {}]
  %s4 = sld [smem:[#allocation0]]
  $region30: #{tpu_custom_call.1} parent=0
    _
  %s6 = ssub.s32 1, %s4
  %s7 = scalar_select 0, %s6, %s4
  $region1: #{tpu_custom_call.1} parent=0
    #allocation2 [shape = 'u8[4096]{0}', space=vmem, size = 0x1000, scoped, tag = 'input window, operand 0, single buffered']
    #allocation3 [shape = 's32[1]{0}', space=sflag, size = 0x4, scoped, tag = 'scoped memory for tpu_custom_call.1']
    #allocation4 [shape = 's32[1]{0}', space=sflag, size = 0x4, scoped, tag = 'scoped memory for tpu_custom_call.1']
    #allocation5 [shape = 'u8[32768]{0}', space=vmem, size = 0x8000, scoped, tag = 'input window, operand 1, single buffered']
    #allocation6 [shape = 's32[1]{0}', space=sflag, size = 0x4, scoped, tag = 'scoped memory for tpu_custom_call.1']
    #allocation7 [shape = 'u8[8192]{0}', space=vmem, size = 0x2000, scoped, tag = 'output window, operand 0, single buffered']
    %8 = vsyncpa [#allocation3], 0
    %9 = vsyncpa [#allocation6], 0
    %10 = vsyncpa [#allocation4], 0
    // Predicated region
    $region2: #{tpu_custom_call.1} parent=1 // pred_check
      _
    $region3: #{tpu_custom_call.1} parent=1 // pred_check_branch
      %12 = sbr.rel (0) target = $region5
    $region4: #{tpu_custom_call.1} parent=1 // pred_region
      %s14 = ssub.s32 128, 128
      %15 = vsyncadd [#allocation3], %s14
      %s16 = sshll.u32 [#allocation2], 4
      %s17 = int_to_ptr.vmem [resolvable:$true] %s16
      %22 = dma.hbm_to_vmem [thread:$0]  %s0, 128, %s17, [#allocation3], 64, 64, 4
    $region5: #{tpu_custom_call.1} parent=1 // pred_fallthru
      _
    // Predicated region
    $region6: #{tpu_custom_call.1} parent=1 // pred_check
      _
    $region7: #{tpu_custom_call.1} parent=1 // pred_check_branch
      %24 = sbr.rel (0) target = $region9
    $region8: #{tpu_custom_call.1} parent=1 // pred_region
      %s26 = ssub.s32 1024, 1024
      %27 = vsyncadd [#allocation6], %s26
      %s28 = sshll.u32 [#allocation5], 4
      %s29 = int_to_ptr.vmem [resolvable:$true] %s28
      %34 = dma.hbm_to_vmem [thread:$0]  %s1, 1024, %s29, [#allocation6], 64, 64, 4
    $region9: #{tpu_custom_call.1} parent=1 // pred_fallthru
      _
    // Predicated region
    $region10: #{tpu_custom_call.1} parent=1 // pred_check
      _
    $region11: #{tpu_custom_call.1} parent=1 // pred_check_branch
      %36 = sbr.rel (0) target = $region13
    $region12: #{tpu_custom_call.1} parent=1 // pred_region
      _
    $region13: #{tpu_custom_call.1} parent=1 // pred_fallthru
      _
    // Predicated region
    $region14: #{tpu_custom_call.1} parent=1 // pred_check
      _
    $region15: #{tpu_custom_call.1} parent=1 // pred_check_branch
      %38 = sbr.rel (0) target = $region17
    $region16: #{tpu_custom_call.1} parent=1 // pred_region
      %39 = dma.done [#allocation3], 128
    $region17: #{tpu_custom_call.1} parent=1 // pred_fallthru
      _
    // Predicated region
    $region18: #{tpu_custom_call.1} parent=1 // pred_check
      _
    $region19: #{tpu_custom_call.1} parent=1 // pred_check_branch
      %41 = sbr.rel (0) target = $region21
    $region20: #{tpu_custom_call.1} parent=1 // pred_region
      %42 = dma.done [#allocation6], 1024
    $region21: #{tpu_custom_call.1} parent=1 // pred_fallthru
      _
    %v44 = vld [vmem:[#allocation2] sm:$0xf]
    %v45 = vld [vmem:[#allocation2 + $0x4] sm:$0xf]
    %v46 = vld [vmem:[#allocation5] sm:$0xf]
    %v47 = vld [vmem:[#allocation5 + $0x4] sm:$0xf]
    %v48 = vld [vmem:[#allocation5 + $0x8] sm:$0xf]
    %v49 = vld [vmem:[#allocation5 + $0xc] sm:$0xf]
    %v50 = vld [vmem:[#allocation5 + $0x10] sm:$0xf]
    %v51 = vld [vmem:[#allocation5 + $0x14] sm:$0xf]
    %v52 = vld [vmem:[#allocation5 + $0x18] sm:$0xf]
    %v53 = vld [vmem:[#allocation5 + $0x1c] sm:$0xf]
    %v54 = vld [vmem:[#allocation5 + $0x20] sm:$0xf]
    %v55 = vld [vmem:[#allocation5 + $0x24] sm:$0xf]
    %v56 = vld [vmem:[#allocation5 + $0x28] sm:$0xf]
    %v57 = vld [vmem:[#allocation5 + $0x2c] sm:$0xf]
    %v58 = vld [vmem:[#allocation5 + $0x30] sm:$0xf]
    %v59 = vld [vmem:[#allocation5 + $0x34] sm:$0xf]
    %v60 = vld [vmem:[#allocation5 + $0x38] sm:$0xf]
    %v61 = vld [vmem:[#allocation5 + $0x3c] sm:$0xf]
    %v62 = vld [vmem:[%s2] sm:$0x1]
    %v63 = vunpack.c.l.bf16 %v62
    %v64 = vlaneseq
    %v65 = vshrl.u32 %v64, 7
    %v66 = vsub.s32 0, %v65
    %v67 = vrot.slane %v63, %v66
    %v70 = vunpack.c.l.b16 %v44
    %v71 = vunpack.c.l.b16 %v45
    %v72 = vpack.c.b16 %v71, %v70
    %v90 = vunpack.c.l.b16 %v46
    %v91 = vunpack.c.l.b16 %v47
    %v92 = vunpack.c.l.b16 %v48
    %v93 = vunpack.c.l.b16 %v49
    %v94 = vunpack.c.l.b16 %v50
    %v95 = vunpack.c.l.b16 %v51
    %v96 = vunpack.c.l.b16 %v52
    %v97 = vunpack.c.l.b16 %v53
    %v98 = vunpack.c.l.b16 %v54
    %v99 = vunpack.c.l.b16 %v55
    %v100 = vunpack.c.l.b16 %v56
    %v101 = vunpack.c.l.b16 %v57
    %v102 = vunpack.c.l.b16 %v58
    %v103 = vunpack.c.l.b16 %v59
    %v104 = vunpack.c.l.b16 %v60
    %v105 = vunpack.c.l.b16 %v61
    %v106 = vpack.c.b16 %v91, %v90
    %v107 = vpack.c.b16 %v93, %v92
    %v108 = vpack.c.b16 %v95, %v94
    %v109 = vpack.c.b16 %v97, %v96
    %v110 = vpack.c.b16 %v99, %v98
    %v111 = vpack.c.b16 %v101, %v100
    %v112 = vpack.c.b16 %v103, %v102
    %v113 = vpack.c.b16 %v105, %v104
    %122 = vmatprep.subr.bf16.mxu0 0
    %123 = vmatpush1.bf16.msra.mxu0 %v113
    %124 = vmatprep.subr.bf16.mxu0 0
    %125 = vmatpush1.bf16.msra.mxu0 %v112
    %126 = vmatprep.subr.bf16.mxu0 0
    %127 = vmatpush1.bf16.msra.mxu0 %v111
    %128 = vmatprep.subr.bf16.mxu0 0
    %129 = vmatpush1.bf16.msra.mxu0 %v110
    %130 = vmatprep.subr.bf16.mxu0 0
    %131 = vmatpush1.bf16.msra.mxu0 %v109
    %132 = vmatprep.subr.bf16.mxu0 0
    %133 = vmatpush1.bf16.msra.mxu0 %v108
    %134 = vmatprep.subr.bf16.mxu0 0
    %135 = vmatpush1.bf16.msra.mxu0 %v107
    %136 = vmatprep.subr.bf16.mxu0 0
    %137 = vmatpush1.bf16.msra.mxu0 %v106
    %138 = vmatprep.subr.bf16.mxu0 0
    %139 = vmatpush2.bf16.msra.mxu0 0
    %140 = vmatprep.subr.bf16.mxu0 0
    %141 = vmatpush2.bf16.msra.mxu0 0
    %142 = vmatprep.subr.bf16.mxu0 0
    %143 = vmatpush2.bf16.msra.mxu0 0
    %144 = vmatprep.subr.bf16.mxu0 0
    %145 = vmatpush2.bf16.msra.mxu0 0
    %146 = vmatprep.subr.bf16.mxu0 0
    %147 = vmatpush2.bf16.msra.mxu0 0
    %148 = vmatprep.subr.bf16.mxu0 0
    %149 = vmatpush2.bf16.msra.mxu0 0
    %150 = vmatprep.subr.bf16.mxu0 0
    %151 = vmatpush2.bf16.msra.mxu0 0
    %152 = vmatprep.subr.bf16.mxu0 0
    %153 = vmatpush2.bf16.msra.mxu0 0
    %154 = vmatprep.mubr.bf16.mxu0 0
    %155 = vmatmul.mubr.bf16.gmra.mxu0 %v72
    %v156 = vpop.f32.mrf.mxu0
    %v157 = vadd.f32 %v67, %v156
    %v158 = vpop.f32.mrf.mxu0
    %v159 = vpop.f32.mrf.mxu0
    %v160 = vadd.f32 %v67, %v159
    %v161 = vpop.f32.mrf.mxu0
    %162 = vdwg.mxu0
    %163 = vst [vmem:[#allocation7] sm:$0xff] %v157
    %164 = vst [vmem:[#allocation7 + $0x8] sm:$0xff] %v160
    // Predicated region
    $region22: #{tpu_custom_call.1} parent=1 // pred_check
      _
    $region23: #{tpu_custom_call.1} parent=1 // pred_check_branch
      %166 = sbr.rel (0) target = $region25
    $region24: #{tpu_custom_call.1} parent=1 // pred_region
      %s168 = ssub.s32 256, 256
      %169 = vsyncadd [#allocation4], %s168
      %s170 = sshll.u32 [#allocation7], 4
      %s171 = int_to_ptr.vmem [resolvable:$true] %s170
      %176 = dma.vmem_to_hbm [thread:$0]  %s171, 256, %s3, [#allocation4], 128, 128, 8
    $region25: #{tpu_custom_call.1} parent=1 // pred_fallthru
      _
    // Predicated region
    $region26: #{tpu_custom_call.1} parent=1 // pred_check
      _
    $region27: #{tpu_custom_call.1} parent=1 // pred_check_branch
      %178 = sbr.rel (0) target = $region29
    $region28: #{tpu_custom_call.1} parent=1 // pred_region
      %179 = dma.done [#allocation4], 256
    $region29: #{tpu_custom_call.1} parent=1 // pred_fallthru
      _
    %180 = vsyncpa [#allocation3], 1
    %181 = vsyncpa [#allocation6], 1
    %182 = vsyncpa [#allocation4], 1

</llo_original>
